<compile_context>
chip_gen: v7x
topology: tpu7x:2x2x1
jax: 0.10.0
libtpu: 0.0.40
codegen_flags: <defaults>
</compile_context>

<pallas_src>
import jax
import jax.numpy as jnp
from jax.experimental import pallas as pl
from jax.experimental.pallas import tpu as pltpu


def _make_kernel(B, N, Dout, Dp):
    inv_d = 1.0 / float(Dout)

    def kernel(x_ref, cond_ref, wc_ref, bc_ref, wf_ref, bf_ref, ew_ref, ep_ref, o_ref):
        # Fused weight-normed cond projection: one (B, Dc) @ (Dc, 2*Dp) MXU matmul.
        # The +1.0 on gamma is already folded into the gamma half of the bias;
        # padded channels have zero weight & bias, so gamma/beta are 0 there.
        gb = jnp.dot(cond_ref[...], wc_ref[...],
                     preferred_element_type=jnp.float32) + bc_ref[...]       # (B, 2*Dp)
        gamma = gb[:, :Dp]                                                    # (B, Dp)
        beta = gb[:, Dp:]                                                     # (B, Dp)

        # FiLM linear over all B*N rows at once (single MXU matmul).
        h = jnp.dot(x_ref[...], wf_ref[...],
                    preferred_element_type=jnp.float32) + bf_ref[...]         # (B*N, Dp)

        # Affine-free LayerNorm over the *real* Dout channels.  Padded channels of h are
        # exactly zero (zero-padded wf/bf), so sum/Dout and E[h^2]-mean^2 give the exact
        # biased statistics over the real channels (matches the reference).
        mean = jnp.sum(h, axis=-1, keepdims=True) * inv_d
        var = jnp.sum(h * h, axis=-1, keepdims=True) * inv_d - mean * mean
        hn = (h - mean) * jax.lax.rsqrt(var + 1e-5)

        # Per-batch FiLM + ReLU, fully-connected aggregation, residual, ReLU.
        # B is tiny -> static unroll; results are concatenated (sublane-aligned chunks of
        # N=16 rows) into ONE lane-dense (B*N, Dp) store instead of per-batch stores.
        outs = []
        for b in range(B):
            rows = slice(b * N, (b + 1) * N)
            nf = jnp.maximum(hn[rows] * gamma[b:b + 1] + beta[b:b + 1], 0.0)  # (N, Dp)
            ew = ew_ref[b] * ep_ref[b]                                        # (N, N)
            nb = jnp.dot(ew, nf, preferred_element_type=jnp.float32)          # (N, Dp)
            outs.append(jnp.maximum(nf + nb, 0.0))
        o_ref[...] = jnp.concatenate(outs, axis=0).astype(o_ref.dtype)        # (B*N, Dp)

    return kernel


@jax.jit
def cond_node_feat(x, cond, wg, bg, wb, bb, wf, bf, e_weights, e_params):
    B, N, Din = x.shape
    Dc = cond.shape[-1]
    Dout = wf.shape[1]
    Dp = max(128, ((Dout + 127) // 128) * 128)     # lane-dense padded channel dim

    def pad_cols(a):
        return jnp.pad(a, ((0, 0), (0, Dp - a.shape[-1])))

    wf_p = pad_cols(wf)                                                  # (Din, Dp)
    bf_p = pad_cols(bf)                                                  # (1, Dp)
    wc_p = jnp.concatenate([pad_cols(wg), pad_cols(wb)], axis=-1)        # (Dc, 2*Dp)
    bc_p = jnp.concatenate([pad_cols(bg + 1.0), pad_cols(bb)], axis=-1)  # (1, 2*Dp)

    x_flat = x.reshape(B * N, Din)

    out_p = pl.pallas_call(
        _make_kernel(B, N, Dout, Dp),
        out_shape=jax.ShapeDtypeStruct((B * N, Dp), x.dtype),
        grid=(1,),   # single step: whole problem fits VMEM, no pipeline ramp needed
        in_specs=[
            pl.BlockSpec((B * N, Din), lambda i: (0, 0)),      # node feats (flattened)
            pl.BlockSpec((B, Dc), lambda i: (0, 0)),           # cond feats
            pl.BlockSpec((Dc, 2 * Dp), lambda i: (0, 0)),      # fused [W_gamma | W_beta]
            pl.BlockSpec((1, 2 * Dp), lambda i: (0, 0)),       # fused [b_gamma+1 | b_beta]
            pl.BlockSpec((Din, Dp), lambda i: (0, 0)),         # W_film (padded)
            pl.BlockSpec((1, Dp), lambda i: (0, 0)),           # b_film (padded)
            pl.BlockSpec((B, N, N), lambda i: (0, 0, 0)),      # edge weights
            pl.BlockSpec((B, N, N), lambda i: (0, 0, 0)),      # edge params
        ],
        out_specs=pl.BlockSpec((B * N, Dp), lambda i: (0, 0)), # flat, lane-dense output
        compiler_params=pltpu.CompilerParams(dimension_semantics=("arbitrary",)),
    )(x_flat, cond, wc_p, bc_p, wf_p, bf_p, e_weights, e_params)

    # Restore (B, N, .) and drop padded channels (all-zero by construction).
    return out_p.reshape(B, N, Dp)[:, :, :Dout]


def reference(x, cond, wg, bg, wb, bb, wf, bf, ew, ep):
    gamma = cond @ wg + bg + 1.0
    beta = cond @ wb + bb
    h = x @ wf + bf
    mean = h.mean(-1, keepdims=True)
    var = ((h - mean) ** 2).mean(-1, keepdims=True)
    hn = (h - mean) / jnp.sqrt(var + 1e-5)
    new_feats = jnp.maximum(hn * gamma[:, None, :] + beta[:, None, :], 0.0)
    w = ew * ep
    nb = jnp.einsum('bij,bjc->bic', w, new_feats)
    return jnp.maximum(new_feats + nb, 0.0)


if __name__ == "__main__":
    B, N = 2, 16
    node_dim, cond_dim, out_dim = 32, 32, 32

    key = jax.random.PRNGKey(0)
    keys = jax.random.split(key, 8)

    # inputs
    x = jax.random.normal(keys[0], (B, N, node_dim), jnp.float32)
    cond = jax.random.normal(keys[1], (B, cond_dim), jnp.float32)
    e_weights = jax.random.uniform(keys[2], (B, N, N), jnp.float32)
    e_params = jax.random.uniform(keys[3], (B, N, N), jnp.float32)

    # cond_proj_l : weight_norm(Linear(cond_dim, 2*out_dim))  -> W = g * V / ||V||
    V = jax.random.normal(keys[4], (cond_dim, 2 * out_dim), jnp.float32) * 0.1
    g = jnp.abs(jax.random.normal(keys[5], (1, 2 * out_dim), jnp.float32)) + 0.5
    Wc = g * V / jnp.sqrt(jnp.sum(V * V, axis=0, keepdims=True))
    bc = jnp.linspace(-0.1, 0.1, 2 * out_dim, dtype=jnp.float32)
    wg, wb = Wc[:, :out_dim], Wc[:, out_dim:]                # chunk(2, dim=-1)
    bg, bb = bc[:out_dim].reshape(1, out_dim), bc[out_dim:].reshape(1, out_dim)

    # film_l : Linear(node_dim, out_dim) (+ affine-free layernorm handled in kernel)
    wf = jax.random.normal(keys[6], (node_dim, out_dim), jnp.float32) * 0.1
    bf = (jax.random.normal(keys[7], (out_dim,), jnp.float32) * 0.05).reshape(1, out_dim)

    out = cond_node_feat(x, cond, wg, bg, wb, bb, wf, bf, e_weights, e_params)
    out = jax.block_until_ready(out)

    ref = reference(x, cond, wg, bg, wb, bb, wf, bf, e_weights, e_params)
    assert out.shape == (B, N, out_dim)
    assert jnp.allclose(out, ref, rtol=1e-4, atol=1e-4), "mismatch vs pure-JAX reference"

    print("KERNEL_OK")
</pallas_src>

<mosaic_0001>
module attributes {stable_mosaic.version = 11 : i64} {
  func.func @kernel(%arg0: i32, %arg1: memref<32x32xf32, #tpu.memory_space<vmem>>, %arg2: memref<2x32xf32, #tpu.memory_space<vmem>>, %arg3: memref<32x256xf32, #tpu.memory_space<vmem>>, %arg4: memref<1x256xf32, #tpu.memory_space<vmem>>, %arg5: memref<32x128xf32, #tpu.memory_space<vmem>>, %arg6: memref<1x128xf32, #tpu.memory_space<vmem>>, %arg7: memref<2x16x16xf32, #tpu.memory_space<vmem>>, %arg8: memref<2x16x16xf32, #tpu.memory_space<vmem>>, %arg9: memref<32x128xf32, #tpu.memory_space<vmem>>) attributes {dimension_semantics = [#tpu.dimension_semantics<arbitrary>], iteration_bounds = array<i64: 1>, scalar_prefetch = 0 : i64, scratch_operands = 0 : i64, tpu.core_type = #tpu.core_type<tc>, window_params = [{pipeline_mode = #tpu.pipeline_mode<synchronous>, transform_indices = @transform_0, window_bounds = array<i64: 32, 32>}, {pipeline_mode = #tpu.pipeline_mode<synchronous>, transform_indices = @transform_1, window_bounds = array<i64: 2, 32>}, {pipeline_mode = #tpu.pipeline_mode<synchronous>, transform_indices = @transform_2, window_bounds = array<i64: 32, 256>}, {pipeline_mode = #tpu.pipeline_mode<synchronous>, transform_indices = @transform_3, window_bounds = array<i64: 1, 256>}, {pipeline_mode = #tpu.pipeline_mode<synchronous>, transform_indices = @transform_4, window_bounds = array<i64: 32, 128>}, {pipeline_mode = #tpu.pipeline_mode<synchronous>, transform_indices = @transform_5, window_bounds = array<i64: 1, 128>}, {pipeline_mode = #tpu.pipeline_mode<synchronous>, transform_indices = @transform_6, window_bounds = array<i64: 2, 16, 16>}, {pipeline_mode = #tpu.pipeline_mode<synchronous>, transform_indices = @transform_7, window_bounds = array<i64: 2, 16, 16>}, {pipeline_mode = #tpu.pipeline_mode<synchronous>, transform_indices = @transform_8, window_bounds = array<i64: 32, 128>}]} {
    %c0 = arith.constant 0 : index
    %c0_0 = arith.constant 0 : index
    %0 = vector.load %arg2[%c0, %c0_0] : memref<2x32xf32, #tpu.memory_space<vmem>>, vector<2x32xf32>
    %c0_1 = arith.constant 0 : index
    %c0_2 = arith.constant 0 : index
    %1 = vector.load %arg3[%c0_1, %c0_2] : memref<32x256xf32, #tpu.memory_space<vmem>>, vector<32x256xf32>
    %cst = arith.constant dense<0.000000e+00> : vector<2x256xf32>
    %2 = tpu.matmul %0, %1, %cst {dimension_numbers = #tpu.dot_dimension_numbers<[1], [0], [0], [1], [0, 0, 1, 1], [], []>} : vector<2x32xf32>, vector<32x256xf32>, vector<2x256xf32> -> vector<2x256xf32>
    %c0_3 = arith.constant 0 : index
    %c0_4 = arith.constant 0 : index
    %3 = vector.load %arg4[%c0_3, %c0_4] : memref<1x256xf32, #tpu.memory_space<vmem>>, vector<1x256xf32>
    %4 = vector.broadcast %3 : vector<1x256xf32> to vector<2x256xf32>
    %5 = arith.addf %2, %4 : vector<2x256xf32>
    %6 = vector.extract_strided_slice %5 {offsets = [0, 0], sizes = [2, 128], strides = [1, 1]} : vector<2x256xf32> to vector<2x128xf32>
    %7 = vector.extract_strided_slice %5 {offsets = [0, 128], sizes = [2, 128], strides = [1, 1]} : vector<2x256xf32> to vector<2x128xf32>
    %c0_5 = arith.constant 0 : index
    %c0_6 = arith.constant 0 : index
    %8 = vector.load %arg1[%c0_5, %c0_6] : memref<32x32xf32, #tpu.memory_space<vmem>>, vector<32x32xf32>
    %c0_7 = arith.constant 0 : index
    %c0_8 = arith.constant 0 : index
    %9 = vector.load %arg5[%c0_7, %c0_8] : memref<32x128xf32, #tpu.memory_space<vmem>>, vector<32x128xf32>
    %cst_9 = arith.constant dense<0.000000e+00> : vector<32x128xf32>
    %10 = tpu.matmul %8, %9, %cst_9 {dimension_numbers = #tpu.dot_dimension_numbers<[1], [0], [0], [1], [0, 0, 1, 1], [], []>} : vector<32x32xf32>, vector<32x128xf32>, vector<32x128xf32> -> vector<32x128xf32>
    %c0_10 = arith.constant 0 : index
    %c0_11 = arith.constant 0 : index
    %11 = vector.load %arg6[%c0_10, %c0_11] : memref<1x128xf32, #tpu.memory_space<vmem>>, vector<1x128xf32>
    %12 = vector.broadcast %11 : vector<1x128xf32> to vector<32x128xf32>
    %13 = arith.addf %10, %12 : vector<32x128xf32>
    %cst_12 = arith.constant dense<0.000000e+00> : vector<32xf32>
    %14 = vector.multi_reduction <add>, %13, %cst_12 [1] : vector<32x128xf32> to vector<32xf32>
    %15 = vector.shape_cast %14 : vector<32xf32> to vector<32x1xf32>
    %cst_13 = arith.constant 3.125000e-02 : f32
    %16 = vector.broadcast %cst_13 : f32 to vector<32x1xf32>
    %17 = arith.mulf %15, %16 : vector<32x1xf32>
    %18 = arith.mulf %13, %13 : vector<32x128xf32>
    %cst_14 = arith.constant dense<0.000000e+00> : vector<32xf32>
    %19 = vector.multi_reduction <add>, %18, %cst_14 [1] : vector<32x128xf32> to vector<32xf32>
    %20 = vector.shape_cast %19 : vector<32xf32> to vector<32x1xf32>
    %cst_15 = arith.constant 3.125000e-02 : f32
    %21 = vector.broadcast %cst_15 : f32 to vector<32x1xf32>
    %22 = arith.mulf %20, %21 : vector<32x1xf32>
    %23 = arith.mulf %17, %17 : vector<32x1xf32>
    %24 = arith.subf %22, %23 : vector<32x1xf32>
    %25 = vector.broadcast %17 : vector<32x1xf32> to vector<32x128xf32>
    %26 = arith.subf %13, %25 : vector<32x128xf32>
    %cst_16 = arith.constant 9.99999974E-6 : f32
    %27 = vector.broadcast %cst_16 : f32 to vector<32x1xf32>
    %28 = arith.addf %24, %27 : vector<32x1xf32>
    %29 = math.rsqrt %28 : vector<32x1xf32>
    %30 = vector.broadcast %29 : vector<32x1xf32> to vector<32x128xf32>
    %31 = arith.mulf %26, %30 : vector<32x128xf32>
    %32 = vector.extract_strided_slice %31 {offsets = [0, 0], sizes = [16, 128], strides = [1, 1]} : vector<32x128xf32> to vector<16x128xf32>
    %33 = vector.extract_strided_slice %6 {offsets = [0, 0], sizes = [1, 128], strides = [1, 1]} : vector<2x128xf32> to vector<1x128xf32>
    %34 = vector.broadcast %33 : vector<1x128xf32> to vector<16x128xf32>
    %35 = arith.mulf %32, %34 : vector<16x128xf32>
    %36 = vector.extract_strided_slice %7 {offsets = [0, 0], sizes = [1, 128], strides = [1, 1]} : vector<2x128xf32> to vector<1x128xf32>
    %37 = vector.broadcast %36 : vector<1x128xf32> to vector<16x128xf32>
    %38 = arith.addf %35, %37 : vector<16x128xf32>
    %cst_17 = arith.constant 0.000000e+00 : f32
    %39 = vector.broadcast %cst_17 : f32 to vector<16x128xf32>
    %40 = arith.maximumf %38, %39 : vector<16x128xf32>
    %c0_18 = arith.constant 0 : index
    %c0_19 = arith.constant 0 : index
    %c0_20 = arith.constant 0 : index
    %41 = vector.load %arg7[%c0_18, %c0_19, %c0_20] : memref<2x16x16xf32, #tpu.memory_space<vmem>>, vector<1x16x16xf32>
    %42 = vector.shape_cast %41 : vector<1x16x16xf32> to vector<16x16xf32>
    %c0_21 = arith.constant 0 : index
    %c0_22 = arith.constant 0 : index
    %c0_23 = arith.constant 0 : index
    %43 = vector.load %arg8[%c0_21, %c0_22, %c0_23] : memref<2x16x16xf32, #tpu.memory_space<vmem>>, vector<1x16x16xf32>
    %44 = vector.shape_cast %43 : vector<1x16x16xf32> to vector<16x16xf32>
    %45 = arith.mulf %42, %44 : vector<16x16xf32>
    %cst_24 = arith.constant dense<0.000000e+00> : vector<16x128xf32>
    %46 = tpu.matmul %45, %40, %cst_24 {dimension_numbers = #tpu.dot_dimension_numbers<[1], [0], [0], [1], [0, 0, 1, 1], [], []>} : vector<16x16xf32>, vector<16x128xf32>, vector<16x128xf32> -> vector<16x128xf32>
    %47 = arith.addf %40, %46 : vector<16x128xf32>
    %cst_25 = arith.constant 0.000000e+00 : f32
    %48 = vector.broadcast %cst_25 : f32 to vector<16x128xf32>
    %49 = arith.maximumf %47, %48 : vector<16x128xf32>
    %50 = vector.extract_strided_slice %31 {offsets = [16, 0], sizes = [16, 128], strides = [1, 1]} : vector<32x128xf32> to vector<16x128xf32>
    %51 = vector.extract_strided_slice %6 {offsets = [1, 0], sizes = [1, 128], strides = [1, 1]} : vector<2x128xf32> to vector<1x128xf32>
    %52 = vector.broadcast %51 : vector<1x128xf32> to vector<16x128xf32>
    %53 = arith.mulf %50, %52 : vector<16x128xf32>
    %54 = vector.extract_strided_slice %7 {offsets = [1, 0], sizes = [1, 128], strides = [1, 1]} : vector<2x128xf32> to vector<1x128xf32>
    %55 = vector.broadcast %54 : vector<1x128xf32> to vector<16x128xf32>
    %56 = arith.addf %53, %55 : vector<16x128xf32>
    %cst_26 = arith.constant 0.000000e+00 : f32
    %57 = vector.broadcast %cst_26 : f32 to vector<16x128xf32>
    %58 = arith.maximumf %56, %57 : vector<16x128xf32>
    %c1 = arith.constant 1 : index
    %c0_27 = arith.constant 0 : index
    %c0_28 = arith.constant 0 : index
    %59 = vector.load %arg7[%c1, %c0_27, %c0_28] : memref<2x16x16xf32, #tpu.memory_space<vmem>>, vector<1x16x16xf32>
    %60 = vector.shape_cast %59 : vector<1x16x16xf32> to vector<16x16xf32>
    %c1_29 = arith.constant 1 : index
    %c0_30 = arith.constant 0 : index
    %c0_31 = arith.constant 0 : index
    %61 = vector.load %arg8[%c1_29, %c0_30, %c0_31] : memref<2x16x16xf32, #tpu.memory_space<vmem>>, vector<1x16x16xf32>
    %62 = vector.shape_cast %61 : vector<1x16x16xf32> to vector<16x16xf32>
    %63 = arith.mulf %60, %62 : vector<16x16xf32>
    %cst_32 = arith.constant dense<0.000000e+00> : vector<16x128xf32>
    %64 = tpu.matmul %63, %58, %cst_32 {dimension_numbers = #tpu.dot_dimension_numbers<[1], [0], [0], [1], [0, 0, 1, 1], [], []>} : vector<16x16xf32>, vector<16x128xf32>, vector<16x128xf32> -> vector<16x128xf32>
    %65 = arith.addf %58, %64 : vector<16x128xf32>
    %cst_33 = arith.constant 0.000000e+00 : f32
    %66 = vector.broadcast %cst_33 : f32 to vector<16x128xf32>
    %67 = arith.maximumf %65, %66 : vector<16x128xf32>
    %68 = tpu.concatenate %49, %67 in 0 : vector<16x128xf32>, vector<16x128xf32> -> vector<32x128xf32>
    %c0_34 = arith.constant 0 : index
    %c0_35 = arith.constant 0 : index
    %69 = vector.load %arg9[%c0_34, %c0_35] : memref<32x128xf32, #tpu.memory_space<vmem>>, vector<32x128xf32>
    tpu.vector_store %arg9[%c0_34, %c0_35], %68 {strides = array<i32>} : memref<32x128xf32, #tpu.memory_space<vmem>>, vector<32x128xf32>,
    return
  }
  func.func @transform_0(%arg0: i32) -> (i32, i32) {
    %c0_i32 = arith.constant 0 : i32
    %c0_i32_0 = arith.constant 0 : i32
    %c0_i32_1 = arith.constant 0 : i32
    return %c0_i32, %c0_i32_0 : i32, i32
  }
  func.func @transform_1(%arg0: i32) -> (i32, i32) {
    %c0_i32 = arith.constant 0 : i32
    %c0_i32_0 = arith.constant 0 : i32
    %c0_i32_1 = arith.constant 0 : i32
    return %c0_i32, %c0_i32_0 : i32, i32
  }
  func.func @transform_2(%arg0: i32) -> (i32, i32) {
    %c0_i32 = arith.constant 0 : i32
    %c0_i32_0 = arith.constant 0 : i32
    %c0_i32_1 = arith.constant 0 : i32
    return %c0_i32, %c0_i32_0 : i32, i32
  }
  func.func @transform_3(%arg0: i32) -> (i32, i32) {
    %c0_i32 = arith.constant 0 : i32
    %c0_i32_0 = arith.constant 0 : i32
    %c0_i32_1 = arith.constant 0 : i32
    return %c0_i32, %c0_i32_0 : i32, i32
  }
  func.func @transform_4(%arg0: i32) -> (i32, i32) {
    %c0_i32 = arith.constant 0 : i32
    %c0_i32_0 = arith.constant 0 : i32
    %c0_i32_1 = arith.constant 0 : i32
    return %c0_i32, %c0_i32_0 : i32, i32
  }
  func.func @transform_5(%arg0: i32) -> (i32, i32) {
    %c0_i32 = arith.constant 0 : i32
    %c0_i32_0 = arith.constant 0 : i32
    %c0_i32_1 = arith.constant 0 : i32
    return %c0_i32, %c0_i32_0 : i32, i32
  }
  func.func @transform_6(%arg0: i32) -> (i32, i32, i32) {
    %c0_i32 = arith.constant 0 : i32
    %c0_i32_0 = arith.constant 0 : i32
    %c0_i32_1 = arith.constant 0 : i32
    %c0_i32_2 = arith.constant 0 : i32
    return %c0_i32, %c0_i32_0, %c0_i32_1 : i32, i32, i32
  }
  func.func @transform_7(%arg0: i32) -> (i32, i32, i32) {
    %c0_i32 = arith.constant 0 : i32
    %c0_i32_0 = arith.constant 0 : i32
    %c0_i32_1 = arith.constant 0 : i32
    %c0_i32_2 = arith.constant 0 : i32
    return %c0_i32, %c0_i32_0, %c0_i32_1 : i32, i32, i32
  }
  func.func @transform_8(%arg0: i32) -> (i32, i32) {
    %c0_i32 = arith.constant 0 : i32
    %c0_i32_0 = arith.constant 0 : i32
    %c0_i32_1 = arith.constant 0 : i32
    return %c0_i32, %c0_i32_0 : i32, i32
  }
}

</mosaic_0001>

<llo_original>
// kernel: cond_node_feat.1
$region0: #{cond_node_feat.1}
  #allocation0 [shape = 'u32[]', space=smem, size = 0x4, offset = 0x4, fixed_abs, tag = 'smem constant byte address 0x4 - core index']
  #allocation1 [shape = 'u32[144,128]{1,0:T(1,128)}', space=vmem, size = 0x12000, scoped, tag = 'internal scratch']
  %s0 = inlined_call_operand.vmem [shape: f32[32,32], index: 0, kind: input, shape index: {}]
  %s1 = inlined_call_operand.vmem [shape: f32[2,32], index: 1, kind: input, shape index: {}]
  %s2 = inlined_call_operand.vmem [shape: f32[32,256], index: 2, kind: input, shape index: {}]
  %s3 = inlined_call_operand.vmem [shape: f32[1,256], index: 3, kind: input, shape index: {}]
  %s4 = inlined_call_operand.vmem [shape: f32[32,128], index: 4, kind: input, shape index: {}]
  %s5 = inlined_call_operand.vmem [shape: f32[1,128], index: 5, kind: input, shape index: {}]
  %s6 = inlined_call_operand.vmem [shape: f32[2,16,16], index: 6, kind: input, shape index: {}]
  %s7 = inlined_call_operand.vmem [shape: f32[2,16,16], index: 7, kind: input, shape index: {}]
  %s8 = inlined_call_operand.hbm [shape: f32[32,128], index: 8, kind: output, shape index: {}]
  %s9 = sld [smem:[#allocation0]]
  $region42: #{cond_node_feat.1} parent=0
    _
  %s11 = ssub.s32 1, %s9
  %s12 = scalar_select 0, %s11, %s9
  $region1: #{cond_node_feat.1} parent=0
    #allocation2 [shape = 'u8[16384]{0}', space=vmem, size = 0x4000, scoped, tag = 'output window, operand 0, single buffered']
    #allocation3 [shape = 's32[1]{0}', space=sflag, size = 0x4, scoped, tag = 'scoped memory for cond_node_feat.1']
    %13 = vsyncpa [#allocation3], 0
    // Predicated region
    $region2: #{cond_node_feat.1} parent=1 // pred_check
      _
    $region3: #{cond_node_feat.1} parent=1 // pred_check_branch
      %15 = sbr.rel (0) target = $region5
    $region4: #{cond_node_feat.1} parent=1 // pred_region
      _
    $region5: #{cond_node_feat.1} parent=1 // pred_fallthru
      _
    // Predicated region
    $region6: #{cond_node_feat.1} parent=1 // pred_check
      _
    $region7: #{cond_node_feat.1} parent=1 // pred_check_branch
      %17 = sbr.rel (0) target = $region9
    $region8: #{cond_node_feat.1} parent=1 // pred_region
      _
    $region9: #{cond_node_feat.1} parent=1 // pred_fallthru
      _
    // Predicated region
    $region10: #{cond_node_feat.1} parent=1 // pred_check
      _
    $region11: #{cond_node_feat.1} parent=1 // pred_check_branch
      %19 = sbr.rel (0) target = $region13
    $region12: #{cond_node_feat.1} parent=1 // pred_region
      _
    $region13: #{cond_node_feat.1} parent=1 // pred_fallthru
      _
    // Predicated region
    $region14: #{cond_node_feat.1} parent=1 // pred_check
      _
    $region15: #{cond_node_feat.1} parent=1 // pred_check_branch
      %21 = sbr.rel (0) target = $region17
    $region16: #{cond_node_feat.1} parent=1 // pred_region
      _
    $region17: #{cond_node_feat.1} parent=1 // pred_fallthru
      _
    // Predicated region
    $region18: #{cond_node_feat.1} parent=1 // pred_check
      _
    $region19: #{cond_node_feat.1} parent=1 // pred_check_branch
      %23 = sbr.rel (0) target = $region21
    $region20: #{cond_node_feat.1} parent=1 // pred_region
      _
    $region21: #{cond_node_feat.1} parent=1 // pred_fallthru
      _
    // Predicated region
    $region22: #{cond_node_feat.1} parent=1 // pred_check
      _
    $region23: #{cond_node_feat.1} parent=1 // pred_check_branch
      %25 = sbr.rel (0) target = $region25
    $region24: #{cond_node_feat.1} parent=1 // pred_region
      _
    $region25: #{cond_node_feat.1} parent=1 // pred_fallthru
      _
    // Predicated region
    $region26: #{cond_node_feat.1} parent=1 // pred_check
      _
    $region27: #{cond_node_feat.1} parent=1 // pred_check_branch
      %27 = sbr.rel (0) target = $region29
    $region28: #{cond_node_feat.1} parent=1 // pred_region
      _
    $region29: #{cond_node_feat.1} parent=1 // pred_fallthru
      _
    // Predicated region
    $region30: #{cond_node_feat.1} parent=1 // pred_check
      _
    $region31: #{cond_node_feat.1} parent=1 // pred_check_branch
      %29 = sbr.rel (0) target = $region33
    $region32: #{cond_node_feat.1} parent=1 // pred_region
      _
    $region33: #{cond_node_feat.1} parent=1 // pred_fallthru
      _
    %v30 = vld [vmem:[%s1] sm:$0x3]
    %v31 = vld [vmem:[%s2] sm:$0xff]
    %v32 = vld [vmem:[%s2 + $0x8] sm:$0xff]
    %v33 = vld [vmem:[%s2 + $0x10] sm:$0xff]
    %v34 = vld [vmem:[%s2 + $0x18] sm:$0xff]
    %v35 = vld [vmem:[%s2 + $0x20] sm:$0xff]
    %v36 = vld [vmem:[%s2 + $0x28] sm:$0xff]
    %v37 = vld [vmem:[%s2 + $0x30] sm:$0xff]
    %v38 = vld [vmem:[%s2 + $0x38] sm:$0xff]
    %v39 = vld [vmem:[%s3] sm:$0x3]
    %v41 = vlaneseq
    %v42 = vshrl.u32 %v41, 7
    %v43 = vsub.s32 0, %v42
    %v44 = vrot.slane %v39, %v43
    %v45 = vlaneseq
    %v46 = vshrl.u32 %v45, 7
    %v47 = vsub.s32 1, %v46
    %v48 = vrot.slane %v39, %v47
    %vm51 = vcmask 261120
    %v53 = vsel %vm51, %v30, 0
    %55 = vmatprep.subr.mxu0 %v32
    %56 = vmatpush1.msra.mxu0 %v31
    %57 = vmatprep.subr.mxu0 %v34
    %58 = vmatpush1.msra.mxu0 %v33
    %59 = vmatprep.subr.mxu0 %v36
    %60 = vmatpush1.msra.mxu0 %v35
    %61 = vmatprep.subr.mxu0 %v38
    %62 = vmatpush1.msra.mxu0 %v37
    %63 = vmatprep.subr.mxu0 0.0
    %64 = vmatpush1.msra.mxu0 0.0
    %65 = vmatprep.subr.mxu0 0.0
    %66 = vmatpush1.msra.mxu0 0.0
    %67 = vmatprep.subr.mxu0 0.0
    %68 = vmatpush1.msra.mxu0 0.0
    %69 = vmatprep.subr.mxu0 0.0
    %70 = vmatpush1.msra.mxu0 0.0
    %71 = vmatprep.subr.mxu0 0.0
    %72 = vmatpush1.msra.mxu0 0.0
    %73 = vmatprep.subr.mxu0 0.0
    %74 = vmatpush1.msra.mxu0 0.0
    %75 = vmatprep.subr.mxu0 0.0
    %76 = vmatpush1.msra.mxu0 0.0
    %77 = vmatprep.subr.mxu0 0.0
    %78 = vmatpush1.msra.mxu0 0.0
    %79 = vmatprep.subr.mxu0 0.0
    %80 = vmatpush1.msra.mxu0 0.0
    %81 = vmatprep.subr.mxu0 0.0
    %82 = vmatpush1.msra.mxu0 0.0
    %83 = vmatprep.subr.mxu0 0.0
    %84 = vmatpush1.msra.mxu0 0.0
    %85 = vmatprep.subr.mxu0 0.0
    %86 = vmatpush1.msra.mxu0 0.0
    %87 = vmatprep.subr.mxu0 0.0
    %88 = vmatpush1.msra.mxu0 0.0
    %89 = vmatprep.subr.mxu0 0.0
    %90 = vmatpush1.msra.mxu0 0.0
    %91 = vmatprep.subr.mxu0 0.0
    %92 = vmatpush1.msra.mxu0 0.0
    %93 = vmatprep.subr.mxu0 0.0
    %94 = vmatpush1.msra.mxu0 0.0
    %95 = vmatprep.subr.mxu0 0.0
    %96 = vmatpush1.msra.mxu0 0.0
    %97 = vmatprep.subr.mxu0 0.0
    %98 = vmatpush1.msra.mxu0 0.0
    %99 = vmatprep.subr.mxu0 0.0
    %100 = vmatpush1.msra.mxu0 0.0
    %101 = vmatprep.subr.mxu0 0.0
    %102 = vmatpush1.msra.mxu0 0.0
    %103 = vmatprep.subr.mxu0 0.0
    %104 = vmatpush1.msra.mxu0 0.0
    %105 = vmatprep.subr.mxu0 0.0
    %106 = vmatpush1.msra.mxu0 0.0
    %107 = vmatprep.subr.mxu0 0.0
    %108 = vmatpush1.msra.mxu0 0.0
    %109 = vmatprep.subr.mxu0 0.0
    %110 = vmatpush1.msra.mxu0 0.0
    %111 = vmatprep.subr.mxu0 0.0
    %112 = vmatpush1.msra.mxu0 0.0
    %113 = vmatprep.subr.mxu0 0.0
    %114 = vmatpush1.msra.mxu0 0.0
    %115 = vmatprep.subr.mxu0 0.0
    %116 = vmatpush1.msra.mxu0 0.0
    %117 = vmatprep.subr.mxu0 0.0
    %118 = vmatpush1.msra.mxu0 0.0
    %119 = vmatprep.mubr.f32.mxu0 0.0
    %120 = vmatmul.mubr.f32.gmra.mrb[0].mxu0 %v53
    %v121 = vpop.f32.mrb[0].mxu0
    %v122 = vadd.f32 %v44, %v121
    %v123 = vpop.f32.mrb[0].mxu0
    %v124 = vadd.f32 %v48, %v123
    %125 = vdwg.mxu0
    %v126 = vld [vmem:[%s0] sm:$0xff]
    %v127 = vld [vmem:[%s0 + $0x8] sm:$0xff]
    %v128 = vld [vmem:[%s0 + $0x10] sm:$0xff]
    %v129 = vld [vmem:[%s0 + $0x18] sm:$0xff]
    %v130 = vld [vmem:[%s4] sm:$0xff]
    %v131 = vld [vmem:[%s4 + $0x8] sm:$0xff]
    %v132 = vld [vmem:[%s4 + $0x10] sm:$0xff]
    %v133 = vld [vmem:[%s4 + $0x18] sm:$0xff]
    %v134 = vld [vmem:[%s5] sm:$0x1]
    %v136 = vlaneseq
    %v137 = vshrl.u32 %v136, 7
    %v138 = vsub.s32 0, %v137
    %v139 = vrot.slane %v134, %v138
    %v142 = vsel %vm51, %v126, 0
    %v145 = vsel %vm51, %v127, 0
    %v148 = vsel %vm51, %v128, 0
    %v151 = vsel %vm51, %v129, 0
    %153 = vmatprep.subr.mxu0 0.0
    %154 = vmatpush1.msra.mxu0 %v130
    %155 = vmatprep.subr.mxu0 0.0
    %156 = vmatpush1.msra.mxu0 %v131
    %157 = vmatprep.subr.mxu0 0.0
    %158 = vmatpush1.msra.mxu0 %v132
    %159 = vmatprep.subr.mxu0 0.0
    %160 = vmatpush1.msra.mxu0 %v133
    %161 = vmatprep.subr.mxu0 0.0
    %162 = vmatpush1.msra.mxu0 0.0
    %163 = vmatprep.subr.mxu0 0.0
    %164 = vmatpush1.msra.mxu0 0.0
    %165 = vmatprep.subr.mxu0 0.0
    %166 = vmatpush1.msra.mxu0 0.0
    %167 = vmatprep.subr.mxu0 0.0
    %168 = vmatpush1.msra.mxu0 0.0
    %169 = vmatprep.subr.mxu0 0.0
    %170 = vmatpush1.msra.mxu0 0.0
    %171 = vmatprep.subr.mxu0 0.0
    %172 = vmatpush1.msra.mxu0 0.0
    %173 = vmatprep.subr.mxu0 0.0
    %174 = vmatpush1.msra.mxu0 0.0
    %175 = vmatprep.subr.mxu0 0.0
    %176 = vmatpush1.msra.mxu0 0.0
    %177 = vmatprep.subr.mxu0 0.0
    %178 = vmatpush1.msra.mxu0 0.0
    %179 = vmatprep.subr.mxu0 0.0
    %180 = vmatpush1.msra.mxu0 0.0
    %181 = vmatprep.subr.mxu0 0.0
    %182 = vmatpush1.msra.mxu0 0.0
    %183 = vmatprep.subr.mxu0 0.0
    %184 = vmatpush1.msra.mxu0 0.0
    %185 = vmatprep.subr.mxu0 0.0
    %186 = vmatpush1.msra.mxu0 0.0
    %187 = vmatprep.subr.mxu0 0.0
    %188 = vmatpush1.msra.mxu0 0.0
    %189 = vmatprep.subr.mxu0 0.0
    %190 = vmatpush1.msra.mxu0 0.0
    %191 = vmatprep.subr.mxu0 0.0
    %192 = vmatpush1.msra.mxu0 0.0
    %193 = vmatprep.subr.mxu0 0.0
    %194 = vmatpush1.msra.mxu0 0.0
    %195 = vmatprep.subr.mxu0 0.0
    %196 = vmatpush1.msra.mxu0 0.0
    %197 = vmatprep.subr.mxu0 0.0
    %198 = vmatpush1.msra.mxu0 0.0
    %199 = vmatprep.subr.mxu0 0.0
    %200 = vmatpush1.msra.mxu0 0.0
    %201 = vmatprep.subr.mxu0 0.0
    %202 = vmatpush1.msra.mxu0 0.0
    %203 = vmatprep.subr.mxu0 0.0
    %204 = vmatpush1.msra.mxu0 0.0
    %205 = vmatprep.subr.mxu0 0.0
    %206 = vmatpush1.msra.mxu0 0.0
    %207 = vmatprep.subr.mxu0 0.0
    %208 = vmatpush1.msra.mxu0 0.0
    %209 = vmatprep.subr.mxu0 0.0
    %210 = vmatpush1.msra.mxu0 0.0
    %211 = vmatprep.subr.mxu0 0.0
    %212 = vmatpush1.msra.mxu0 0.0
    %213 = vmatprep.subr.mxu0 0.0
    %214 = vmatpush1.msra.mxu0 0.0
    %215 = vmatprep.subr.mxu0 0.0
    %216 = vmatpush1.msra.mxu0 0.0
    %217 = vmatprep.mubr.f32.mxu0 0.0
    %218 = vmatmul.mubr.f32.gmra.mrb[0].mxu0 %v142
    %v219 = vpop.f32.mrb[0].mxu0
    %v220 = vadd.f32 %v139, %v219
    %v221 = vpop.f32.mrb[0].mxu0
    %222 = vmatprep.mubr.f32.mxu0 0.0
    %223 = vmatmul.mubr.f32.gmra.mrb[0].mxu0 %v145
    %v224 = vpop.f32.mrb[0].mxu0
    %v225 = vadd.f32 %v139, %v224
    %v226 = vpop.f32.mrb[0].mxu0
    %227 = vmatprep.mubr.f32.mxu0 0.0
    %228 = vmatmul.mubr.f32.gmra.mrb[0].mxu0 %v148
    %v229 = vpop.f32.mrb[0].mxu0
    %v230 = vadd.f32 %v139, %v229
    %v231 = vpop.f32.mrb[0].mxu0
    %232 = vmatprep.mubr.f32.mxu0 0.0
    %233 = vmatmul.mubr.f32.gmra.mrb[0].mxu0 %v151
    %v234 = vpop.f32.mrb[0].mxu0
    %v235 = vadd.f32 %v139, %v234
    %v236 = vpop.f32.mrb[0].mxu0
    %237 = vdwg.mxu0
    %238 = vadd.xlane.f32.xlu0 %v220
    %v239 = vpop.xlane.xlu0 %238
    %240 = vadd.xlane.f32.xlu0 %v225
    %v241 = vpop.xlane.xlu0 %240
    %242 = vadd.xlane.f32.xlu0 %v230
    %v243 = vpop.xlane.xlu0 %242
    %244 = vadd.xlane.f32.xlu0 %v235
    %v245 = vpop.xlane.xlu0 %244
    %v246 = vmul.f32 %v239, 0.03125
    %v247 = vmul.f32 %v241, 0.03125
    %v248 = vmul.f32 %v243, 0.03125
    %v249 = vmul.f32 %v245, 0.03125
    %v250 = vmul.f32 %v220, %v220
    %v251 = vmul.f32 %v225, %v225
    %v252 = vmul.f32 %v230, %v230
    %v253 = vmul.f32 %v235, %v235
    %254 = vadd.xlane.f32.xlu0 %v250
    %v255 = vpop.xlane.xlu0 %254
    %256 = vadd.xlane.f32.xlu0 %v251
    %v257 = vpop.xlane.xlu0 %256
    %258 = vadd.xlane.f32.xlu0 %v252
    %v259 = vpop.xlane.xlu0 %258
    %260 = vadd.xlane.f32.xlu0 %v253
    %v261 = vpop.xlane.xlu0 %260
    %v262 = vmul.f32 %v255, 0.03125
    %v263 = vmul.f32 %v257, 0.03125
    %v264 = vmul.f32 %v259, 0.03125
    %v265 = vmul.f32 %v261, 0.03125
    %v266 = vmul.f32 %v246, %v246
    %v267 = vmul.f32 %v247, %v247
    %v268 = vmul.f32 %v248, %v248
    %v269 = vmul.f32 %v249, %v249
    %v270 = vsub.f32 %v262, %v266
    %v271 = vsub.f32 %v263, %v267
    %v272 = vsub.f32 %v264, %v268
    %v273 = vsub.f32 %v265, %v269
    %v274 = vsub.f32 %v220, %v246
    %v275 = vsub.f32 %v225, %v247
    %v276 = vsub.f32 %v230, %v248
    %v277 = vsub.f32 %v235, %v249
    %v278 = vadd.f32 %v270, 1e-05
    %v279 = vadd.f32 %v271, 1e-05
    %v280 = vadd.f32 %v272, 1e-05
    %v281 = vadd.f32 %v273, 1e-05
    %v282 = vrsqrt.pop %v278
    %v283 = vrsqrt.pop %v279
    %v284 = vrsqrt.pop %v280
    %v285 = vrsqrt.pop %v281
    %v286 = vmul.f32 %v274, %v282
    %v287 = vmul.f32 %v275, %v283
    %v288 = vmul.f32 %v276, %v284
    %v289 = vmul.f32 %v277, %v285
    %v290 = vlaneseq
    %v291 = vshrl.u32 %v290, 7
    %v292 = vsub.s32 0, %v291
    %v293 = vrot.slane %v122, %v292
    %v294 = vmul.f32 %v286, %v293
    %v295 = vmul.f32 %v287, %v293
    %v296 = vlaneseq
    %v297 = vshrl.u32 %v296, 7
    %v298 = vsub.s32 0, %v297
    %v299 = vrot.slane %v124, %v298
    %v300 = vadd.f32 %v294, %v299
    %v301 = vadd.f32 %v295, %v299
    %v302 = vmax.f32 %v300, 0.0
    %v303 = vmax.f32 %v301, 0.0
    %v304 = vld [vmem:[%s6] sm:$0xff]
    %v305 = vld [vmem:[%s6 + $0x8] sm:$0xff]
    %v306 = vld [vmem:[%s7] sm:$0xff]
    %v307 = vld [vmem:[%s7 + $0x8] sm:$0xff]
    %v308 = vmul.f32 %v304, %v306
    %v309 = vmul.f32 %v305, %v307
    %vm310 = vcmask 130048
    %v312 = vsel %vm310, %v308, 0
    %v315 = vsel %vm310, %v309, 0
    %317 = vmatprep.subr.mxu0 0.0
    %318 = vmatpush1.msra.mxu0 %v302
    %319 = vmatprep.subr.mxu0 0.0
    %320 = vmatpush1.msra.mxu0 %v303
    %321 = vmatprep.subr.mxu0 0.0
    %322 = vmatpush1.msra.mxu0 0.0
    %323 = vmatprep.subr.mxu0 0.0
    %324 = vmatpush1.msra.mxu0 0.0
    %325 = vmatprep.subr.mxu0 0.0
    %326 = vmatpush1.msra.mxu0 0.0
    %327 = vmatprep.subr.mxu0 0.0
    %328 = vmatpush1.msra.mxu0 0.0
    %329 = vmatprep.subr.mxu0 0.0
    %330 = vmatpush1.msra.mxu0 0.0
    %331 = vmatprep.subr.mxu0 0.0
    %332 = vmatpush1.msra.mxu0 0.0
    %333 = vmatprep.subr.mxu0 0.0
    %334 = vmatpush1.msra.mxu0 0.0
    %335 = vmatprep.subr.mxu0 0.0
    %336 = vmatpush1.msra.mxu0 0.0
    %337 = vmatprep.subr.mxu0 0.0
    %338 = vmatpush1.msra.mxu0 0.0
    %339 = vmatprep.subr.mxu0 0.0
    %340 = vmatpush1.msra.mxu0 0.0
    %341 = vmatprep.subr.mxu0 0.0
    %342 = vmatpush1.msra.mxu0 0.0
    %343 = vmatprep.subr.mxu0 0.0
    %344 = vmatpush1.msra.mxu0 0.0
    %345 = vmatprep.subr.mxu0 0.0
    %346 = vmatpush1.msra.mxu0 0.0
    %347 = vmatprep.subr.mxu0 0.0
    %348 = vmatpush1.msra.mxu0 0.0
    %349 = vmatprep.subr.mxu0 0.0
    %350 = vmatpush1.msra.mxu0 0.0
    %351 = vmatprep.subr.mxu0 0.0
    %352 = vmatpush1.msra.mxu0 0.0
    %353 = vmatprep.subr.mxu0 0.0
    %354 = vmatpush1.msra.mxu0 0.0
    %355 = vmatprep.subr.mxu0 0.0
    %356 = vmatpush1.msra.mxu0 0.0
    %357 = vmatprep.subr.mxu0 0.0
    %358 = vmatpush1.msra.mxu0 0.0
    %359 = vmatprep.subr.mxu0 0.0
    %360 = vmatpush1.msra.mxu0 0.0
    %361 = vmatprep.subr.mxu0 0.0
    %362 = vmatpush1.msra.mxu0 0.0
    %363 = vmatprep.subr.mxu0 0.0
    %364 = vmatpush1.msra.mxu0 0.0
    %365 = vmatprep.subr.mxu0 0.0
    %366 = vmatpush1.msra.mxu0 0.0
    %367 = vmatprep.subr.mxu0 0.0
    %368 = vmatpush1.msra.mxu0 0.0
    %369 = vmatprep.subr.mxu0 0.0
    %370 = vmatpush1.msra.mxu0 0.0
    %371 = vmatprep.subr.mxu0 0.0
    %372 = vmatpush1.msra.mxu0 0.0
    %373 = vmatprep.subr.mxu0 0.0
    %374 = vmatpush1.msra.mxu0 0.0
    %375 = vmatprep.subr.mxu0 0.0
    %376 = vmatpush1.msra.mxu0 0.0
    %377 = vmatprep.subr.mxu0 0.0
    %378 = vmatpush1.msra.mxu0 0.0
    %379 = vmatprep.subr.mxu0 0.0
    %380 = vmatpush1.msra.mxu0 0.0
    %381 = vmatprep.mubr.f32.mxu0 0.0
    %382 = vmatmul.mubr.f32.gmra.mrb[0].mxu0 %v312
    %v383 = vpop.f32.mrb[0].mxu0
    %v384 = vadd.f32 0.0, %v383
    %v385 = vpop.f32.mrb[0].mxu0
    %386 = vmatprep.mubr.f32.mxu0 0.0
    %387 = vmatmul.mubr.f32.gmra.mrb[0].mxu0 %v315
    %v388 = vpop.f32.mrb[0].mxu0
    %v389 = vadd.f32 0.0, %v388
    %v390 = vpop.f32.mrb[0].mxu0
    %391 = vdwg.mxu0
    %v392 = vadd.f32 %v302, %v384
    %v393 = vadd.f32 %v303, %v389
    %v394 = vmax.f32 %v392, 0.0
    %v395 = vmax.f32 %v393, 0.0
    %v396 = vlaneseq
    %v397 = vshrl.u32 %v396, 7
    %v398 = vsub.s32 1, %v397
    %v399 = vrot.slane %v122, %v398
    %v400 = vmul.f32 %v288, %v399
    %v401 = vmul.f32 %v289, %v399
    %v402 = vlaneseq
    %v403 = vshrl.u32 %v402, 7
    %v404 = vsub.s32 1, %v403
    %v405 = vrot.slane %v124, %v404
    %v406 = vadd.f32 %v400, %v405
    %v407 = vadd.f32 %v401, %v405
    %v408 = vmax.f32 %v406, 0.0
    %v409 = vmax.f32 %v407, 0.0
    %s410 = scalar_lea.vmem %s6, 16
    %v411 = vld [vmem:[%s410] sm:$0xff]
    %v412 = vld [vmem:[%s410 + $0x8] sm:$0xff]
    %s413 = scalar_lea.vmem %s7, 16
    %v414 = vld [vmem:[%s413] sm:$0xff]
    %v415 = vld [vmem:[%s413 + $0x8] sm:$0xff]
    %v416 = vmul.f32 %v411, %v414
    %v417 = vmul.f32 %v412, %v415
    %v419 = vsel %vm310, %v416, 0
    %v422 = vsel %vm310, %v417, 0
    %424 = vmatprep.subr.mxu0 0.0
    %425 = vmatpush1.msra.mxu0 %v408
    %426 = vmatprep.subr.mxu0 0.0
    %427 = vmatpush1.msra.mxu0 %v409
    %428 = vmatprep.subr.mxu0 0.0
    %429 = vmatpush1.msra.mxu0 0.0
    %430 = vmatprep.subr.mxu0 0.0
    %431 = vmatpush1.msra.mxu0 0.0
    %432 = vmatprep.subr.mxu0 0.0
    %433 = vmatpush1.msra.mxu0 0.0
    %434 = vmatprep.subr.mxu0 0.0
    %435 = vmatpush1.msra.mxu0 0.0
    %436 = vmatprep.subr.mxu0 0.0
    %437 = vmatpush1.msra.mxu0 0.0
    %438 = vmatprep.subr.mxu0 0.0
    %439 = vmatpush1.msra.mxu0 0.0
    %440 = vmatprep.subr.mxu0 0.0
    %441 = vmatpush1.msra.mxu0 0.0
    %442 = vmatprep.subr.mxu0 0.0
    %443 = vmatpush1.msra.mxu0 0.0
    %444 = vmatprep.subr.mxu0 0.0
    %445 = vmatpush1.msra.mxu0 0.0
    %446 = vmatprep.subr.mxu0 0.0
    %447 = vmatpush1.msra.mxu0 0.0
    %448 = vmatprep.subr.mxu0 0.0
    %449 = vmatpush1.msra.mxu0 0.0
    %450 = vmatprep.subr.mxu0 0.0
    %451 = vmatpush1.msra.mxu0 0.0
    %452 = vmatprep.subr.mxu0 0.0
    %453 = vmatpush1.msra.mxu0 0.0
    %454 = vmatprep.subr.mxu0 0.0
    %455 = vmatpush1.msra.mxu0 0.0
    %456 = vmatprep.subr.mxu0 0.0
    %457 = vmatpush1.msra.mxu0 0.0
    %458 = vmatprep.subr.mxu0 0.0
    %459 = vmatpush1.msra.mxu0 0.0
    %460 = vmatprep.subr.mxu0 0.0
    %461 = vmatpush1.msra.mxu0 0.0
    %462 = vmatprep.subr.mxu0 0.0
    %463 = vmatpush1.msra.mxu0 0.0
    %464 = vmatprep.subr.mxu0 0.0
    %465 = vmatpush1.msra.mxu0 0.0
    %466 = vmatprep.subr.mxu0 0.0
    %467 = vmatpush1.msra.mxu0 0.0
    %468 = vmatprep.subr.mxu0 0.0
    %469 = vmatpush1.msra.mxu0 0.0
    %470 = vmatprep.subr.mxu0 0.0
    %471 = vmatpush1.msra.mxu0 0.0
    %472 = vmatprep.subr.mxu0 0.0
    %473 = vmatpush1.msra.mxu0 0.0
    %474 = vmatprep.subr.mxu0 0.0
    %475 = vmatpush1.msra.mxu0 0.0
    %476 = vmatprep.subr.mxu0 0.0
    %477 = vmatpush1.msra.mxu0 0.0
    %478 = vmatprep.subr.mxu0 0.0
    %479 = vmatpush1.msra.mxu0 0.0
    %480 = vmatprep.subr.mxu0 0.0
    %481 = vmatpush1.msra.mxu0 0.0
    %482 = vmatprep.subr.mxu0 0.0
    %483 = vmatpush1.msra.mxu0 0.0
    %484 = vmatprep.subr.mxu0 0.0
    %485 = vmatpush1.msra.mxu0 0.0
    %486 = vmatprep.subr.mxu0 0.0
    %487 = vmatpush1.msra.mxu0 0.0
    %488 = vmatprep.mubr.f32.mxu0 0.0
    %489 = vmatmul.mubr.f32.gmra.mrb[0].mxu0 %v419
    %v490 = vpop.f32.mrb[0].mxu0
    %v491 = vadd.f32 0.0, %v490
    %v492 = vpop.f32.mrb[0].mxu0
    %493 = vmatprep.mubr.f32.mxu0 0.0
    %494 = vmatmul.mubr.f32.gmra.mrb[0].mxu0 %v422
    %v495 = vpop.f32.mrb[0].mxu0
    %v496 = vadd.f32 0.0, %v495
    %v497 = vpop.f32.mrb[0].mxu0
    %498 = vdwg.mxu0
    %v499 = vadd.f32 %v408, %v491
    %v500 = vadd.f32 %v409, %v496
    %v501 = vmax.f32 %v499, 0.0
    %v502 = vmax.f32 %v500, 0.0
    %503 = vst [vmem:[#allocation2] sm:$0xff] %v394
    %504 = vst [vmem:[#allocation2 + $0x8] sm:$0xff] %v395
    %505 = vst [vmem:[#allocation2 + $0x10] sm:$0xff] %v501
    %506 = vst [vmem:[#allocation2 + $0x18] sm:$0xff] %v502
    // Predicated region
    $region34: #{cond_node_feat.1} parent=1 // pred_check
      _
    $region35: #{cond_node_feat.1} parent=1 // pred_check_branch
      %508 = sbr.rel (0) target = $region37
    $region36: #{cond_node_feat.1} parent=1 // pred_region
      %s510 = ssub.s32 512, 512
      %511 = vsyncadd [#allocation3], %s510
      %s512 = sshll.u32 [#allocation2], 4
      %s513 = int_to_ptr.vmem [resolvable:$true] %s512
      %518 = dma.vmem_to_hbm [thread:$0]  %s513, 512, %s8, [#allocation3], 128, 128, 8
    $region37: #{cond_node_feat.1} parent=1 // pred_fallthru
      _
    // Predicated region
    $region38: #{cond_node_feat.1} parent=1 // pred_check
      _
    $region39: #{cond_node_feat.1} parent=1 // pred_check_branch
      %520 = sbr.rel (0) target = $region41
    $region40: #{cond_node_feat.1} parent=1 // pred_region
      %521 = dma.done [#allocation3], 512
    $region41: #{cond_node_feat.1} parent=1 // pred_fallthru
      _
    %522 = vsyncpa [#allocation3], 1

</llo_original>
